<compile_context>
chip_gen: v7x
topology: tpu7x:2x2x1
jax: 0.10.0
libtpu: 0.0.40
codegen_flags: <defaults>
</compile_context>

<pallas_src>
import functools

import jax
import jax.numpy as jnp
from jax import lax
from jax.experimental import pallas as pl
from jax.experimental.pallas import tpu as pltpu


def _gather_kernel(fwd_ref, x_hbm, o_hbm, sems, *, R, nslots):
    """Per-batch HBM->HBM DMA row gather.

    fwd_ref : SMEM (B*R,) int32 — flattened kept-row index table (batch-major)
    x_hbm   : HBM ref (T, B, C) — untouched rows are never read
    o_hbm   : HBM ref (R, B, C) — written directly by the DMAs
    sems    : DMA semaphores, shape (nslots,)
    """
    b = pl.program_id(0)

    def row_copy(r, slot):
        idx = fwd_ref[b * R + r]                      # SMEM scalar read
        return pltpu.make_async_copy(
            x_hbm.at[idx, b, :],                      # (C,) contiguous row
            o_hbm.at[r, b, :],                        # (C,) contiguous row
            sems.at[slot],
        )

    # Prime the slot pool: keep `nslots` row DMAs in flight.
    for r in range(nslots):                           # static, tiny unroll
        row_copy(r, r).start()

    @pl.loop(0, R)
    def _(r):
        slot = r % nslots
        # Copy `r` lives in this slot; retire it (wait only needs sem + size,
        # so the src index is not re-read from SMEM here).
        pltpu.make_async_copy(
            x_hbm.at[0, 0, :], o_hbm.at[r, b, :], sems.at[slot]
        ).wait()
        # Refill the slot with the next row copy, if any.
        nxt = r + nslots

        @pl.when(nxt < R)
        def _():
            row_copy(nxt, slot).start()


def patch_shuffle(patches, ratio, key):
    """JAX/Pallas equivalent of PatchShuffle.forward.

    patches: (T, B, C) array
    ratio  : float mask ratio (static)
    key    : jax PRNG key (replaces numpy's global RNG, deterministic)
    """
    T, B, C = patches.shape
    remain_T = int(T * (1 - ratio))     # identical expression to the reference
    assert remain_T >= 1, "mask ratio too aggressive: remain_T == 0"
    R = remain_T

    # ---- index generation (bookkeeping; a single vmapped permutation) ------
    keys = jax.random.split(key, B)
    fwd_bt = jax.vmap(lambda k: jax.random.permutation(k, T))(keys)    # (B, T)
    fwd_bt = fwd_bt.astype(jnp.int32)
    forward_indexes = fwd_bt.T                                         # (T, B)
    backward_indexes = jnp.argsort(forward_indexes, axis=0).astype(jnp.int32)
    # kept rows per batch, flattened 1-D for compact SMEM prefetch: (B * R,)
    fwd_flat = fwd_bt[:, :R].reshape(-1)

    # ---- Pallas DMA-gather kernel ------------------------------------------
    nslots = max(1, min(8, R))          # DMAs kept in flight per batch

    cost = pl.CostEstimate(
        flops=0,
        transcendentals=0,
        bytes_accessed=2 * B * R * C * patches.dtype.itemsize + B * R * 4,
    )

    kernel = functools.partial(_gather_kernel, R=R, nslots=nslots)

    out = pl.pallas_call(
        kernel,
        out_shape=jax.ShapeDtypeStruct((R, B, C), patches.dtype),
        grid_spec=pltpu.PrefetchScalarGridSpec(
            num_scalar_prefetch=1,
            grid=(B,),
            in_specs=[pl.BlockSpec(memory_space=pl.ANY)],   # patches stay in HBM
            out_specs=pl.BlockSpec(memory_space=pl.ANY),    # written via DMA
            scratch_shapes=[pltpu.SemaphoreType.DMA((nslots,))],
        ),
        compiler_params=pltpu.CompilerParams(
            dimension_semantics=("parallel",),
        ),
        cost_estimate=cost,
    )(fwd_flat, patches)

    return out, forward_indexes, backward_indexes, remain_T


if __name__ == "__main__":
    key = jax.random.PRNGKey(0)
    k_data, k_perm = jax.random.split(key)

    # small shapes consistent with a (T, B, C) patch tensor
    T, B, C = 16, 8, 128
    ratio = 0.75

    patches = jax.random.normal(k_data, (T, B, C), dtype=jnp.float32)

    shuffled, fwd, bwd, remain_T = patch_shuffle(patches, ratio, k_perm)
    shuffled = jax.block_until_ready(shuffled)

    # reference: pure-JAX gather (same semantics as torch.gather along dim 0)
    ref = jnp.take_along_axis(patches, fwd[:, :, None], axis=0)[:remain_T]

    assert shuffled.shape == (remain_T, B, C)
    assert fwd.shape == (T, B) and bwd.shape == (T, B)
    # DMA gather is a pure copy -> bit-exact equality
    assert bool(jnp.array_equal(shuffled, ref))
    # backward_indexes really inverts forward_indexes
    assert bool(
        jnp.all(
            jnp.take_along_axis(fwd, bwd, axis=0)
            == jnp.arange(T, dtype=jnp.int32)[:, None]
        )
    )

    print("KERNEL_OK")
</pallas_src>

<mosaic_0001>
module attributes {stable_mosaic.version = 11 : i64} {
  func.func @_gather_kernel(%arg0: i32, %arg1: memref<32xi32, #tpu.memory_space<smem>>, %arg2: memref<16x8x128xf32, #tpu.memory_space<any>>, %arg3: memref<4x8x128xf32, #tpu.memory_space<any>>, %arg4: memref<4x!tpu.dma_semaphore, #tpu.memory_space<semaphore_mem>>) attributes {dimension_semantics = [#tpu.dimension_semantics<parallel>], iteration_bounds = array<i64: 8>, scalar_prefetch = 1 : i64, scratch_operands = 1 : i64, tpu.core_type = #tpu.core_type<tc>, window_params = [{}, {}]} {
    %c4_i32 = arith.constant 4 : i32
    %0 = arith.muli %arg0, %c4_i32 : i32
    %c0_i32 = arith.constant 0 : i32
    %1 = arith.addi %0, %c0_i32 : i32
    %2 = arith.index_cast %1 : i32 to index
    %3 = memref.load %arg1[%2] : memref<32xi32, #tpu.memory_space<smem>>
    %c0_i32_0 = arith.constant 0 : i32
    %c0_i32_1 = arith.constant 0 : i32
    %c0_i32_2 = arith.constant 0 : i32
    %4 = tpu.memref_slice %arg2[%3, %arg0, %c0_i32_2] : memref<16x8x128xf32, #tpu.memory_space<any>> -> memref<1x1x128xf32, #tpu.memory_space<any>>
    %5 = tpu.memref_squeeze %4 : memref<1x1x128xf32, #tpu.memory_space<any>> -> memref<128xf32, #tpu.memory_space<any>>
    %c0_i32_3 = arith.constant 0 : i32
    %6 = tpu.memref_slice %arg3[%c0_i32_0, %arg0, %c0_i32_3] : memref<4x8x128xf32, #tpu.memory_space<any>> -> memref<1x1x128xf32, #tpu.memory_space<any>>
    %7 = tpu.memref_squeeze %6 : memref<1x1x128xf32, #tpu.memory_space<any>> -> memref<128xf32, #tpu.memory_space<any>>
    %8 = tpu.memref_slice %arg4[%c0_i32_1] : memref<4x!tpu.dma_semaphore, #tpu.memory_space<semaphore_mem>> -> memref<1x!tpu.dma_semaphore, #tpu.memory_space<semaphore_mem>>
    %9 = tpu.memref_squeeze %8 : memref<1x!tpu.dma_semaphore, #tpu.memory_space<semaphore_mem>> -> memref<!tpu.dma_semaphore, #tpu.memory_space<semaphore_mem>>
    tpu.enqueue_dma source(%5 : memref<128xf32, #tpu.memory_space<any>>) target(%7 : memref<128xf32, #tpu.memory_space<any>>) target_semaphore(%9 : memref<!tpu.dma_semaphore, #tpu.memory_space<semaphore_mem>>)
    %c4_i32_4 = arith.constant 4 : i32
    %10 = arith.muli %arg0, %c4_i32_4 : i32
    %c1_i32 = arith.constant 1 : i32
    %11 = arith.addi %10, %c1_i32 : i32
    %12 = arith.index_cast %11 : i32 to index
    %13 = memref.load %arg1[%12] : memref<32xi32, #tpu.memory_space<smem>>
    %c1_i32_5 = arith.constant 1 : i32
    %c1_i32_6 = arith.constant 1 : i32
    %c0_i32_7 = arith.constant 0 : i32
    %14 = tpu.memref_slice %arg2[%13, %arg0, %c0_i32_7] : memref<16x8x128xf32, #tpu.memory_space<any>> -> memref<1x1x128xf32, #tpu.memory_space<any>>
    %15 = tpu.memref_squeeze %14 : memref<1x1x128xf32, #tpu.memory_space<any>> -> memref<128xf32, #tpu.memory_space<any>>
    %c0_i32_8 = arith.constant 0 : i32
    %16 = tpu.memref_slice %arg3[%c1_i32_5, %arg0, %c0_i32_8] : memref<4x8x128xf32, #tpu.memory_space<any>> -> memref<1x1x128xf32, #tpu.memory_space<any>>
    %17 = tpu.memref_squeeze %16 : memref<1x1x128xf32, #tpu.memory_space<any>> -> memref<128xf32, #tpu.memory_space<any>>
    %18 = tpu.memref_slice %arg4[%c1_i32_6] : memref<4x!tpu.dma_semaphore, #tpu.memory_space<semaphore_mem>> -> memref<1x!tpu.dma_semaphore, #tpu.memory_space<semaphore_mem>>
    %19 = tpu.memref_squeeze %18 : memref<1x!tpu.dma_semaphore, #tpu.memory_space<semaphore_mem>> -> memref<!tpu.dma_semaphore, #tpu.memory_space<semaphore_mem>>
    tpu.enqueue_dma source(%15 : memref<128xf32, #tpu.memory_space<any>>) target(%17 : memref<128xf32, #tpu.memory_space<any>>) target_semaphore(%19 : memref<!tpu.dma_semaphore, #tpu.memory_space<semaphore_mem>>)
    %c4_i32_9 = arith.constant 4 : i32
    %20 = arith.muli %arg0, %c4_i32_9 : i32
    %c2_i32 = arith.constant 2 : i32
    %21 = arith.addi %20, %c2_i32 : i32
    %22 = arith.index_cast %21 : i32 to index
    %23 = memref.load %arg1[%22] : memref<32xi32, #tpu.memory_space<smem>>
    %c2_i32_10 = arith.constant 2 : i32
    %c2_i32_11 = arith.constant 2 : i32
    %c0_i32_12 = arith.constant 0 : i32
    %24 = tpu.memref_slice %arg2[%23, %arg0, %c0_i32_12] : memref<16x8x128xf32, #tpu.memory_space<any>> -> memref<1x1x128xf32, #tpu.memory_space<any>>
    %25 = tpu.memref_squeeze %24 : memref<1x1x128xf32, #tpu.memory_space<any>> -> memref<128xf32, #tpu.memory_space<any>>
    %c0_i32_13 = arith.constant 0 : i32
    %26 = tpu.memref_slice %arg3[%c2_i32_10, %arg0, %c0_i32_13] : memref<4x8x128xf32, #tpu.memory_space<any>> -> memref<1x1x128xf32, #tpu.memory_space<any>>
    %27 = tpu.memref_squeeze %26 : memref<1x1x128xf32, #tpu.memory_space<any>> -> memref<128xf32, #tpu.memory_space<any>>
    %28 = tpu.memref_slice %arg4[%c2_i32_11] : memref<4x!tpu.dma_semaphore, #tpu.memory_space<semaphore_mem>> -> memref<1x!tpu.dma_semaphore, #tpu.memory_space<semaphore_mem>>
    %29 = tpu.memref_squeeze %28 : memref<1x!tpu.dma_semaphore, #tpu.memory_space<semaphore_mem>> -> memref<!tpu.dma_semaphore, #tpu.memory_space<semaphore_mem>>
    tpu.enqueue_dma source(%25 : memref<128xf32, #tpu.memory_space<any>>) target(%27 : memref<128xf32, #tpu.memory_space<any>>) target_semaphore(%29 : memref<!tpu.dma_semaphore, #tpu.memory_space<semaphore_mem>>)
    %c4_i32_14 = arith.constant 4 : i32
    %30 = arith.muli %arg0, %c4_i32_14 : i32
    %c3_i32 = arith.constant 3 : i32
    %31 = arith.addi %30, %c3_i32 : i32
    %32 = arith.index_cast %31 : i32 to index
    %33 = memref.load %arg1[%32] : memref<32xi32, #tpu.memory_space<smem>>
    %c3_i32_15 = arith.constant 3 : i32
    %c3_i32_16 = arith.constant 3 : i32
    %c0_i32_17 = arith.constant 0 : i32
    %34 = tpu.memref_slice %arg2[%33, %arg0, %c0_i32_17] : memref<16x8x128xf32, #tpu.memory_space<any>> -> memref<1x1x128xf32, #tpu.memory_space<any>>
    %35 = tpu.memref_squeeze %34 : memref<1x1x128xf32, #tpu.memory_space<any>> -> memref<128xf32, #tpu.memory_space<any>>
    %c0_i32_18 = arith.constant 0 : i32
    %36 = tpu.memref_slice %arg3[%c3_i32_15, %arg0, %c0_i32_18] : memref<4x8x128xf32, #tpu.memory_space<any>> -> memref<1x1x128xf32, #tpu.memory_space<any>>
    %37 = tpu.memref_squeeze %36 : memref<1x1x128xf32, #tpu.memory_space<any>> -> memref<128xf32, #tpu.memory_space<any>>
    %38 = tpu.memref_slice %arg4[%c3_i32_16] : memref<4x!tpu.dma_semaphore, #tpu.memory_space<semaphore_mem>> -> memref<1x!tpu.dma_semaphore, #tpu.memory_space<semaphore_mem>>
    %39 = tpu.memref_squeeze %38 : memref<1x!tpu.dma_semaphore, #tpu.memory_space<semaphore_mem>> -> memref<!tpu.dma_semaphore, #tpu.memory_space<semaphore_mem>>
    tpu.enqueue_dma source(%35 : memref<128xf32, #tpu.memory_space<any>>) target(%37 : memref<128xf32, #tpu.memory_space<any>>) target_semaphore(%39 : memref<!tpu.dma_semaphore, #tpu.memory_space<semaphore_mem>>)
    %c0_i32_19 = arith.constant 0 : i32
    %c4_i32_20 = arith.constant 4 : i32
    %40 = arith.addi %c0_i32_19, %c4_i32_20 : i32
    %c1_i32_21 = arith.constant 1 : i32
    scf.for %arg5 = %c0_i32_19 to %40 step %c1_i32_21  : i32 {
      %c1_i32_23 = arith.constant 1 : i32
      %41 = arith.muli %arg5, %c1_i32_23 : i32
      %c0_i32_24 = arith.constant 0 : i32
      %42 = arith.addi %c0_i32_24, %41 : i32
      %c4_i32_25 = arith.constant 4 : i32
      %c0_i32_26 = arith.constant 0 : i32
      %43 = arith.cmpi eq, %c4_i32_25, %c0_i32_26 : i32
      %c1_i32_27 = arith.constant 1 : i32
      %44 = arith.select %43, %c1_i32_27, %c4_i32_25 : i32
      %45 = arith.remsi %42, %44 : i32
      %c0_i32_28 = arith.constant 0 : i32
      %46 = arith.cmpi ne, %45, %c0_i32_28 : i32
      %c0_i32_29 = arith.constant 0 : i32
      %47 = arith.cmpi slt, %45, %c0_i32_29 : i32
      %c0_i32_30 = arith.constant 0 : i32
      %48 = arith.cmpi slt, %44, %c0_i32_30 : i32
      %49 = arith.xori %47, %48 : i1
      %50 = arith.andi %49, %46 : i1
      %51 = arith.addi %45, %44 : i32
      %52 = arith.select %50, %51, %45 : i32
      %c0_i32_31 = arith.constant 0 : i32
      %c0_i32_32 = arith.constant 0 : i32
      %c0_i32_33 = arith.constant 0 : i32
      %53 = tpu.memref_slice %arg2[%c0_i32_31, %c0_i32_32, %c0_i32_33] : memref<16x8x128xf32, #tpu.memory_space<any>> -> memref<1x1x128xf32, #tpu.memory_space<any>>
      %54 = tpu.memref_squeeze %53 : memref<1x1x128xf32, #tpu.memory_space<any>> -> memref<128xf32, #tpu.memory_space<any>>
      %c0_i32_34 = arith.constant 0 : i32
      %55 = tpu.memref_slice %arg3[%42, %arg0, %c0_i32_34] : memref<4x8x128xf32, #tpu.memory_space<any>> -> memref<1x1x128xf32, #tpu.memory_space<any>>
      %56 = tpu.memref_squeeze %55 : memref<1x1x128xf32, #tpu.memory_space<any>> -> memref<128xf32, #tpu.memory_space<any>>
      %57 = tpu.memref_slice %arg4[%52] : memref<4x!tpu.dma_semaphore, #tpu.memory_space<semaphore_mem>> -> memref<1x!tpu.dma_semaphore, #tpu.memory_space<semaphore_mem>>
      %58 = tpu.memref_squeeze %57 : memref<1x!tpu.dma_semaphore, #tpu.memory_space<semaphore_mem>> -> memref<!tpu.dma_semaphore, #tpu.memory_space<semaphore_mem>>
      tpu.wait_dma2 semaphore(%58 : memref<!tpu.dma_semaphore, #tpu.memory_space<semaphore_mem>>) src(%54 : memref<128xf32, #tpu.memory_space<any>>) dst(%56 : memref<128xf32, #tpu.memory_space<any>>)
      %c4_i32_35 = arith.constant 4 : i32
      %59 = arith.addi %42, %c4_i32_35 : i32
      %c4_i32_36 = arith.constant 4 : i32
      %60 = arith.cmpi slt, %59, %c4_i32_36 : i32
      %61 = arith.extui %60 : i1 to i32
      %c0_i32_37 = arith.constant 0 : i32
      %62 = arith.cmpi ne, %61, %c0_i32_37 : i32
      scf.if %62 {
        %c4_i32_38 = arith.constant 4 : i32
        %63 = arith.muli %arg0, %c4_i32_38 : i32
        %64 = arith.addi %63, %59 : i32
        %65 = arith.index_cast %64 : i32 to index
        %66 = memref.load %arg1[%65] : memref<32xi32, #tpu.memory_space<smem>>
        %c0_i32_39 = arith.constant 0 : i32
        %67 = tpu.memref_slice %arg2[%66, %arg0, %c0_i32_39] : memref<16x8x128xf32, #tpu.memory_space<any>> -> memref<1x1x128xf32, #tpu.memory_space<any>>
        %68 = tpu.memref_squeeze %67 : memref<1x1x128xf32, #tpu.memory_space<any>> -> memref<128xf32, #tpu.memory_space<any>>
        %c0_i32_40 = arith.constant 0 : i32
        %69 = tpu.memref_slice %arg3[%59, %arg0, %c0_i32_40] : memref<4x8x128xf32, #tpu.memory_space<any>> -> memref<1x1x128xf32, #tpu.memory_space<any>>
        %70 = tpu.memref_squeeze %69 : memref<1x1x128xf32, #tpu.memory_space<any>> -> memref<128xf32, #tpu.memory_space<any>>
        %71 = tpu.memref_slice %arg4[%52] : memref<4x!tpu.dma_semaphore, #tpu.memory_space<semaphore_mem>> -> memref<1x!tpu.dma_semaphore, #tpu.memory_space<semaphore_mem>>
        %72 = tpu.memref_squeeze %71 : memref<1x!tpu.dma_semaphore, #tpu.memory_space<semaphore_mem>> -> memref<!tpu.dma_semaphore, #tpu.memory_space<semaphore_mem>>
        tpu.enqueue_dma source(%68 : memref<128xf32, #tpu.memory_space<any>>) target(%70 : memref<128xf32, #tpu.memory_space<any>>) target_semaphore(%72 : memref<!tpu.dma_semaphore, #tpu.memory_space<semaphore_mem>>)
      } else {
      }
    }
    %c4_i32_22 = arith.constant 4 : i32
    return
  }
}

</mosaic_0001>

<llo_original>
// kernel: tpu_custom_call.1
$region0: #{tpu_custom_call.1}
  #allocation0 [shape = 'u32[]', space=smem, size = 0x4, offset = 0x4, fixed_abs, tag = 'smem constant byte address 0x4 - core index']
  #allocation1 [shape = 'u32[144,128]{1,0:T(1,128)}', space=vmem, size = 0x12000, scoped, tag = 'internal scratch']
  #allocation2 [shape = 's32[4]{0}', space=sflag, size = 0x10, scoped, tag = 'scratch operand']
  #allocation3 [shape = 's32[1]{0}', space=sflag, size = 0x4, scoped, tag = 'scoped memory for tpu_custom_call.1']
  #allocation4 [shape = 'u8[512]{0}', space=smem, size = 0x200, scoped, tag = 'prefetched SMEM operand 0']
  #allocation5 [shape = 's32[]', space=sflag, size = 0x4, offset = 0, fixed_abs, tag = 'sflag constant byte address 0x0 - dummy sync flag']
  #allocation6 [shape = 'u32[0]{0}', space=smem, size = 0, offset = 0, fixed_abs, tag = 'smem constant byte address 0x0 - null']
  #allocation7 [shape = 's32[]', space=sflag, size = 0x4, offset = 0, fixed_abs, tag = 'sflag constant byte address 0x0 - dummy sync flag']
  #allocation8 [shape = 'u32[0]{0}', space=smem, size = 0, offset = 0, fixed_abs, tag = 'smem constant byte address 0x0 - null']
  #allocation9 [shape = 's32[]', space=sflag, size = 0x4, offset = 0, fixed_abs, tag = 'sflag constant byte address 0x0 - dummy sync flag']
  #allocation10 [shape = 'u32[0]{0}', space=smem, size = 0, offset = 0, fixed_abs, tag = 'smem constant byte address 0x0 - null']
  #allocation11 [shape = 's32[]', space=sflag, size = 0x4, offset = 0, fixed_abs, tag = 'sflag constant byte address 0x0 - dummy sync flag']
  #allocation12 [shape = 'u32[0]{0}', space=smem, size = 0, offset = 0, fixed_abs, tag = 'smem constant byte address 0x0 - null']
  #allocation13 [shape = 's32[]', space=sflag, size = 0x4, offset = 0, fixed_abs, tag = 'sflag constant byte address 0x0 - dummy sync flag']
  #allocation14 [shape = 'u32[0]{0}', space=smem, size = 0, offset = 0, fixed_abs, tag = 'smem constant byte address 0x0 - null']
  %s0 = inlined_call_operand.hbm [shape: s32[32], index: 0, kind: input, shape index: {}]
  %s1 = inlined_call_operand.hbm [shape: f32[16,8,128], index: 1, kind: input, shape index: {}]
  %s2 = inlined_call_operand.hbm [shape: f32[4,8,128], index: 2, kind: output, shape index: {}]
  %s3 = sld [smem:[#allocation0]]
  $region20: #{tpu_custom_call.1} parent=0
    _
  %s5 = ssub.s32 1, %s3
  %s6 = scalar_select 0, %s5, %s3
  %8 = dma.hbm_to_smem %s0, 16, [#allocation4], [#allocation3]
  %9 = dma.done [#allocation3], 16
  %10 = sfence
  loop: start=0, step=1, limit=8
  $region2: #{tpu_custom_call.1} parent=0 // loop_pre_header
    _
  $region3: #{tpu_custom_call.1} parent=0 // loop_header
    %s12 = sphi 0, %s16
    %p13 = scmp.ge.s32.totalorder %s12, 8
  $region4: #{tpu_custom_call.1} parent=0 // loop_header_branch
    %15 = sbr.rel (%p13) target = $region8
  $region5: #{tpu_custom_call.1} parent=0 // loop_body
    %s17 = sadd.s32 %s12, 1
    %s18 = smul.u32 %s12, 4
    %s19 = sld [smem:[#allocation4 + %s18]]
    %s20 = smul.u32 %s19, 8
    %s21 = sadd.s32 %s12, %s20
    %s22 = smul.addr %s21, 16
    %s23 = scalar_lea.hbm %s1, %s22
    %s24 = smul.addr %s12, 16
    %s25 = scalar_lea.hbm %s2, %s24
    %s27 = sshll.u32 1, 14
    %s28 = sxor.u32 4294967295, %s27
    %s31 = sshll.u32 3, 24
    %s32 = sxor.u32 4294967295, %s31
    %s33 = sand.u32 0, %s32
    %s35 = sor.u32 %s33, 0
    %38 = dma.general %s23, 16, %s25, [#allocation2], [#allocation5], [#allocation6], %s35, 0
    %s39 = sadd.s32 %s18, 1
    %s40 = sld [smem:[#allocation4 + %s39]]
    %s41 = smul.u32 %s40, 8
    %s42 = sadd.s32 %s12, %s41
    %s43 = smul.addr %s42, 16
    %s44 = scalar_lea.hbm %s1, %s43
    %s45 = sadd.s32 %s12, 8
    %s46 = smul.addr %s45, 16
    %s47 = scalar_lea.hbm %s2, %s46
    %s48 = scalar_lea.sflag [#allocation2], 1
    %s50 = sshll.u32 1, 14
    %s51 = sxor.u32 4294967295, %s50
    %s54 = sshll.u32 3, 24
    %s55 = sxor.u32 4294967295, %s54
    %s56 = sand.u32 0, %s55
    %s58 = sor.u32 %s56, 0
    %61 = dma.general %s44, 16, %s47, %s48, [#allocation7], [#allocation8], %s58, 0
    %s62 = sadd.s32 %s18, 2
    %s63 = sld [smem:[#allocation4 + %s62]]
    %s64 = smul.u32 %s63, 8
    %s65 = sadd.s32 %s12, %s64
    %s66 = smul.addr %s65, 16
    %s67 = scalar_lea.hbm %s1, %s66
    %s68 = sadd.s32 %s12, 16
    %s69 = smul.addr %s68, 16
    %s70 = scalar_lea.hbm %s2, %s69
    %s71 = scalar_lea.sflag [#allocation2], 2
    %s73 = sshll.u32 1, 14
    %s74 = sxor.u32 4294967295, %s73
    %s77 = sshll.u32 3, 24
    %s78 = sxor.u32 4294967295, %s77
    %s79 = sand.u32 0, %s78
    %s81 = sor.u32 %s79, 0
    %84 = dma.general %s67, 16, %s70, %s71, [#allocation9], [#allocation10], %s81, 0
    %s85 = sadd.s32 %s18, 3
    %s86 = sld [smem:[#allocation4 + %s85]]
    %s87 = smul.u32 %s86, 8
    %s88 = sadd.s32 %s12, %s87
    %s89 = smul.addr %s88, 16
    %s90 = scalar_lea.hbm %s1, %s89
    %s91 = sadd.s32 %s12, 24
    %s92 = smul.addr %s91, 16
    %s93 = scalar_lea.hbm %s2, %s92
    %s94 = scalar_lea.sflag [#allocation2], 3
    %s96 = sshll.u32 1, 14
    %s97 = sxor.u32 4294967295, %s96
    %s100 = sshll.u32 3, 24
    %s101 = sxor.u32 4294967295, %s100
    %s102 = sand.u32 0, %s101
    %s104 = sor.u32 %s102, 0
    %107 = dma.general %s90, 16, %s93, %s94, [#allocation11], [#allocation12], %s104, 0
    loop: start=0, step=1, limit=4
    $region9: #{tpu_custom_call.1} parent=5 // loop_pre_header
      _
    $region10: #{tpu_custom_call.1} parent=5 // loop_header
      %s109 = sphi 0, %s113
      %p110 = scmp.ge.s32.totalorder %s109, 4
    $region11: #{tpu_custom_call.1} parent=5 // loop_header_branch
      %112 = sbr.rel (%p110) target = $region15
    $region12: #{tpu_custom_call.1} parent=5 // loop_body
      %p114 = scmp.lt.s32.totalorder %s109, 0
      %s115 = ssub.s32 0, %s109
      %s116 = scalar_select %p114, %s115, %s109
      %s117 = sand.u32 %s116, 3
      %s118 = ssub.s32 0, %s117
      %s119 = scalar_select %p114, %s118, %s117
      %p120 = scmp.ne.s32.totalorder %s119, 0
      %p121 = scmp.lt.s32.totalorder %s119, 0
      %p122 = pnand %p121, %p120
      %p123 = pneg %p122
      %s124 = sadd.s32 %s119, 4
      %s125 = scalar_select %p123, %s124, %s119
      %s126 = scalar_lea.sflag [#allocation2], %s125
      %128 = dma.done %s126, 16
      %s129 = sadd.s32 %s109, 4
      %p130 = scmp.lt.s32.totalorder %s129, 4
      // Predicated region
      $region16: #{tpu_custom_call.1} parent=12 // pred_check
        %p131 = pneg %p130
      $region17: #{tpu_custom_call.1} parent=12 // pred_check_branch
        %133 = sbr.rel (%p131) target = $region19
      $region18: #{tpu_custom_call.1} parent=12 // pred_region
        %s134 = sadd.s32 %s18, %s129
        %s135 = sld [smem:[#allocation4 + %s134]]
        %s136 = smul.u32 %s135, 8
        %s137 = sadd.s32 %s12, %s136
        %s138 = smul.addr %s137, 16
        %s139 = scalar_lea.hbm %s1, %s138
        %s140 = smul.u32 %s129, 8
        %s141 = sadd.s32 %s12, %s140
        %s142 = smul.addr %s141, 16
        %s143 = scalar_lea.hbm %s2, %s142
        %s145 = sshll.u32 1, 14
        %s146 = sxor.u32 4294967295, %s145
        %s149 = sshll.u32 3, 24
        %s150 = sxor.u32 4294967295, %s149
        %s151 = sand.u32 0, %s150
        %s153 = sor.u32 %s151, 0
        %156 = dma.general %s139, 16, %s143, %s126, [#allocation13], [#allocation14], %s153, 0
      $region19: #{tpu_custom_call.1} parent=12 // pred_fallthru
        _
    $region13: #{tpu_custom_call.1} parent=5 // loop_footer
      %s113 = sadd.s32 1, %s109
    $region14: #{tpu_custom_call.1} parent=5 // loop_footer_branch
      %108 = sbr.rel target = $region10
    $region15: #{tpu_custom_call.1} parent=5 // loop_exit
      _
  $region6: #{tpu_custom_call.1} parent=0 // loop_footer
    %s16 = sadd.s32 1, %s12
  $region7: #{tpu_custom_call.1} parent=0 // loop_footer_branch
    %11 = sbr.rel target = $region3
  $region8: #{tpu_custom_call.1} parent=0 // loop_exit
    _
  %157 = vsyncmov [#allocation2]
  %s158 = vpop.sfrf %157
  %p159 = scmp.eq.s32.totalorder %s158, 0
  %p160 = pneg %p159
  %162 = shalt.err (%p160)
  %s163 = scalar_lea.sflag [#allocation2], 1
  %164 = vsyncmov %s163
  %s165 = vpop.sfrf %164
  %p166 = scmp.eq.s32.totalorder %s165, 0
  %p167 = pneg %p166
  %169 = shalt.err (%p167)
  %s170 = scalar_lea.sflag [#allocation2], 2
  %171 = vsyncmov %s170
  %s172 = vpop.sfrf %171
  %p173 = scmp.eq.s32.totalorder %s172, 0
  %p174 = pneg %p173
  %176 = shalt.err (%p174)
  %s177 = scalar_lea.sflag [#allocation2], 3
  %178 = vsyncmov %s177
  %s179 = vpop.sfrf %178
  %p180 = scmp.eq.s32.totalorder %s179, 0
  %p181 = pneg %p180
  %183 = shalt.err (%p181)

</llo_original>
